<compile_context>
chip_gen: v6e
topology: v6e:2x2x1
jax: 0.10.0
libtpu: 0.0.40
codegen_flags: <defaults>
</compile_context>

<pallas_src>
import functools

import jax
import jax.numpy as jnp
from jax.experimental import pallas as pl
from jax.experimental.pallas import tpu as pltpu


def _rmse_partial_kernel(yhat_ref, y_ref, acc_ref, *,
                         block_rows, total_rows, needs_mask):
    """Accumulates per-lane partial sums of (yhat - y)^2 into acc_ref (8, N)."""
    i = pl.program_id(0)

    # Output block index is constant across the grid -> acc_ref is resident in
    # VMEM for the whole reduction; zero it on the first step.
    @pl.when(i == 0)
    def _():
        acc_ref[...] = jnp.zeros_like(acc_ref)

    # Hot path: pure VPU elementwise work.
    d = yhat_ref[...].astype(jnp.float32) - y_ref[...].astype(jnp.float32)
    sq = d * d

    if needs_mask:
        # Zero padded rows of the (possibly ragged) last tile.
        row_ids = i * block_rows + jax.lax.broadcasted_iota(
            jnp.int32, sq.shape, 0)
        sq = jnp.where(row_ids < total_rows, sq, jnp.float32(0.0))

    # Fold the (block_rows, N) tile onto the (8, N) accumulator. Splitting the
    # leading (major) dim is layout-preserving, so this is just a chain of VPU
    # adds -- no cross-lane / cross-sublane movement in the hot loop.
    n = sq.shape[-1]
    acc_ref[...] += sq.reshape(block_rows // 8, 8, n).sum(axis=0)


def _round_up(x, m):
    return ((x + m - 1) // m) * m


def rmse_loss(yhat, y, eps=1e-6, block_rows=None,
              target_tile_bytes=2 * 1024 * 1024):
    """torch: sqrt(F.mse_loss(yhat, y) + eps). Layout-free full reduction."""
    assert yhat.shape == y.shape, (yhat.shape, y.shape)

    # RMSE is layout-free: flatten to 2-D (rows, lanes).
    if yhat.ndim == 1:
        yhat = yhat[None, :]
        y = y[None, :]
    elif yhat.ndim > 2:
        yhat = yhat.reshape(-1, yhat.shape[-1])
        y = y.reshape(-1, y.shape[-1])

    M, N = yhat.shape
    total_n = M * N
    itemsize = jnp.dtype(yhat.dtype).itemsize
    # Sublane packing granularity: 8 rows for 32-bit, 16 for bf16, 32 for int8.
    row_align = max(8, 32 // itemsize)

    if block_rows is None:
        # Biggest tile that keeps 2 inputs x 2 pipeline buffers comfortably
        # under the scoped-VMEM default on every TPU generation
        # (v5e: 16 MiB, v6e/v7x: 32 MiB scoped; v7x: 64 MiB physical).
        budget_rows = max(row_align,
                          (target_tile_bytes // (N * itemsize))
                          // row_align * row_align)
        block_rows = min(_round_up(M, row_align), budget_rows)
    else:
        block_rows = max(row_align, _round_up(block_rows, row_align))

    grid = (pl.cdiv(M, block_rows),)
    needs_mask = (M % block_rows) != 0

    kernel = functools.partial(
        _rmse_partial_kernel,
        block_rows=block_rows,
        total_rows=M,
        needs_mask=needs_mask,
    )

    partial = pl.pallas_call(
        kernel,
        out_shape=jax.ShapeDtypeStruct((8, N), jnp.float32),
        grid_spec=pltpu.PrefetchScalarGridSpec(
            num_scalar_prefetch=0,
            grid=grid,
            in_specs=[
                pl.BlockSpec((block_rows, N), lambda i: (i, 0)),
                pl.BlockSpec((block_rows, N), lambda i: (i, 0)),
            ],
            # Constant index_map -> output acts as the VMEM accumulator across
            # the reduction axis; written back to HBM once at the end.
            out_specs=pl.BlockSpec((8, N), lambda i: (0, 0)),
        ),
        compiler_params=pltpu.CompilerParams(
            dimension_semantics=("arbitrary",),  # reduction axis
        ),
    )(yhat, y)

    # One-time tiny finalize (8*N elements) in the wrapper: mean, +eps, sqrt.
    return jnp.sqrt(jnp.sum(partial) / jnp.float32(total_n) + jnp.float32(eps))


if __name__ == "__main__":
    key = jax.random.PRNGKey(0)
    k1, k2, k3, k4 = jax.random.split(key, 4)

    # Case 1: small regression-style batch, evenly tiled (single big tile).
    yhat = jax.random.normal(k1, (16, 128), dtype=jnp.float32)
    y = jax.random.normal(k2, (16, 128), dtype=jnp.float32)
    loss = rmse_loss(yhat, y, eps=1e-6)
    jax.block_until_ready(loss)
    ref = jnp.sqrt(jnp.mean((yhat - y) ** 2) + 1e-6)
    assert jnp.allclose(loss, ref, rtol=1e-5, atol=1e-6), (loss, ref)

    # Case 2: ragged row count (exercises multi-step grid + masked tail tile).
    yhat2 = jax.random.normal(k3, (40, 128), dtype=jnp.float32)
    y2 = jax.random.normal(k4, (40, 128), dtype=jnp.float32)
    loss2 = rmse_loss(yhat2, y2, eps=1e-6, block_rows=16)
    jax.block_until_ready(loss2)
    ref2 = jnp.sqrt(jnp.mean((yhat2 - y2) ** 2) + 1e-6)
    assert jnp.allclose(loss2, ref2, rtol=1e-5, atol=1e-6), (loss2, ref2)

    print("KERNEL_OK")
</pallas_src>

<mosaic_0001>
module attributes {stable_mosaic.version = 11 : i64} {
  func.func @_rmse_partial_kernel(%arg0: i32, %arg1: memref<16x128xf32, #tpu.memory_space<vmem>>, %arg2: memref<16x128xf32, #tpu.memory_space<vmem>>, %arg3: memref<8x128xf32, #tpu.memory_space<vmem>>) attributes {dimension_semantics = [#tpu.dimension_semantics<arbitrary>], iteration_bounds = array<i64: 1>, scalar_prefetch = 0 : i64, scratch_operands = 0 : i64, tpu.core_type = #tpu.core_type<tc>, window_params = [{transform_indices = @transform_0, window_bounds = array<i64: 16, 128>}, {transform_indices = @transform_1, window_bounds = array<i64: 16, 128>}, {pipeline_mode = #tpu.pipeline_mode<synchronous>, transform_indices = @transform_2, window_bounds = array<i64: 8, 128>}]} {
    %c0_i32 = arith.constant 0 : i32
    %0 = arith.cmpi eq, %arg0, %c0_i32 : i32
    %1 = arith.extui %0 : i1 to i32
    %c0_i32_0 = arith.constant 0 : i32
    %2 = arith.cmpi ne, %1, %c0_i32_0 : i32
    scf.if %2 {
      %cst_8 = arith.constant 0.000000e+00 : f32
      %12 = vector.broadcast %cst_8 : f32 to vector<8x128xf32>
      %c0_9 = arith.constant 0 : index
      %c0_10 = arith.constant 0 : index
      %13 = vector.load %arg3[%c0_9, %c0_10] : memref<8x128xf32, #tpu.memory_space<vmem>>, vector<8x128xf32>
      tpu.vector_store %arg3[%c0_9, %c0_10], %12 {strides = array<i32>} : memref<8x128xf32, #tpu.memory_space<vmem>>, vector<8x128xf32>,
    } else {
    }
    %c0 = arith.constant 0 : index
    %c0_1 = arith.constant 0 : index
    %3 = vector.load %arg1[%c0, %c0_1] : memref<16x128xf32, #tpu.memory_space<vmem>>, vector<16x128xf32>
    %c0_2 = arith.constant 0 : index
    %c0_3 = arith.constant 0 : index
    %4 = vector.load %arg2[%c0_2, %c0_3] : memref<16x128xf32, #tpu.memory_space<vmem>>, vector<16x128xf32>
    %5 = arith.subf %3, %4 : vector<16x128xf32>
    %6 = arith.mulf %5, %5 : vector<16x128xf32>
    %c0_4 = arith.constant 0 : index
    %c0_5 = arith.constant 0 : index
    %7 = vector.load %arg3[%c0_4, %c0_5] : memref<8x128xf32, #tpu.memory_space<vmem>>, vector<8x128xf32>
    %8 = vector.shape_cast %6 : vector<16x128xf32> to vector<2x8x128xf32>
    %cst = arith.constant dense<0.000000e+00> : vector<8x128xf32>
    %9 = vector.multi_reduction <add>, %8, %cst [0] : vector<2x8x128xf32> to vector<8x128xf32>
    %10 = arith.addf %7, %9 : vector<8x128xf32>
    %c0_6 = arith.constant 0 : index
    %c0_7 = arith.constant 0 : index
    %11 = vector.load %arg3[%c0_6, %c0_7] : memref<8x128xf32, #tpu.memory_space<vmem>>, vector<8x128xf32>
    tpu.vector_store %arg3[%c0_6, %c0_7], %10 {strides = array<i32>} : memref<8x128xf32, #tpu.memory_space<vmem>>, vector<8x128xf32>,
    return
  }
  func.func @transform_0(%arg0: i32) -> (i32, i32) {
    %c0_i32 = arith.constant 0 : i32
    %c0_i32_0 = arith.constant 0 : i32
    return %arg0, %c0_i32 : i32, i32
  }
  func.func @transform_1(%arg0: i32) -> (i32, i32) {
    %c0_i32 = arith.constant 0 : i32
    %c0_i32_0 = arith.constant 0 : i32
    return %arg0, %c0_i32 : i32, i32
  }
  func.func @transform_2(%arg0: i32) -> (i32, i32) {
    %c0_i32 = arith.constant 0 : i32
    %c0_i32_0 = arith.constant 0 : i32
    %c0_i32_1 = arith.constant 0 : i32
    return %c0_i32, %c0_i32_0 : i32, i32
  }
}

</mosaic_0001>

<llo_original>
// kernel: tpu_custom_call.1
$region0: #{tpu_custom_call.1}
  #allocation0 [shape = 'u32[]', space=smem, size = 0x4, offset = 0x4, fixed_abs, tag = 'smem constant byte address 0x4 - core index']
  #allocation1 [shape = 'u32[144,128]{1,0:T(1,128)}', space=vmem, size = 0x12000, scoped, tag = 'internal scratch']
  %s0 = inlined_call_operand.hbm [shape: f32[16,128], index: 0, kind: input, shape index: {}]
  %s1 = inlined_call_operand.hbm [shape: f32[16,128], index: 1, kind: input, shape index: {}]
  %s2 = inlined_call_operand.hbm [shape: f32[8,128], index: 2, kind: output, shape index: {}]
  %s3 = sld [smem:[#allocation0]]
  $region30: #{tpu_custom_call.1} parent=0
    _
  %s5 = ssub.s32 1, %s3
  %s6 = scalar_select 0, %s5, %s3
  $region1: #{tpu_custom_call.1} parent=0
    #allocation2 [shape = 'u8[8192]{0}', space=vmem, size = 0x2000, scoped, tag = 'input window, operand 0, single buffered']
    #allocation3 [shape = 's32[1]{0}', space=sflag, size = 0x4, scoped, tag = 'scoped memory for tpu_custom_call.1']
    #allocation4 [shape = 's32[1]{0}', space=sflag, size = 0x4, scoped, tag = 'scoped memory for tpu_custom_call.1']
    #allocation5 [shape = 'u8[8192]{0}', space=vmem, size = 0x2000, scoped, tag = 'input window, operand 1, single buffered']
    #allocation6 [shape = 's32[1]{0}', space=sflag, size = 0x4, scoped, tag = 'scoped memory for tpu_custom_call.1']
    #allocation7 [shape = 'u8[4096]{0}', space=vmem, size = 0x1000, scoped, tag = 'output window, operand 0, single buffered']
    %7 = vsyncpa [#allocation3], 0
    %8 = vsyncpa [#allocation6], 0
    %9 = vsyncpa [#allocation4], 0
    // Predicated region
    $region2: #{tpu_custom_call.1} parent=1 // pred_check
      _
    $region3: #{tpu_custom_call.1} parent=1 // pred_check_branch
      %11 = sbr.rel (0) target = $region5
    $region4: #{tpu_custom_call.1} parent=1 // pred_region
      %s13 = ssub.s32 256, 256
      %14 = vsyncadd [#allocation3], %s13
      %s15 = sshll.u32 [#allocation2], 4
      %s16 = int_to_ptr.vmem [resolvable:$true] %s15
      %21 = dma.hbm_to_vmem [thread:$0]  %s0, 256, %s16, [#allocation3], 128, 128, 8
    $region5: #{tpu_custom_call.1} parent=1 // pred_fallthru
      _
    // Predicated region
    $region6: #{tpu_custom_call.1} parent=1 // pred_check
      _
    $region7: #{tpu_custom_call.1} parent=1 // pred_check_branch
      %23 = sbr.rel (0) target = $region9
    $region8: #{tpu_custom_call.1} parent=1 // pred_region
      %s25 = ssub.s32 256, 256
      %26 = vsyncadd [#allocation6], %s25
      %s27 = sshll.u32 [#allocation5], 4
      %s28 = int_to_ptr.vmem [resolvable:$true] %s27
      %33 = dma.hbm_to_vmem [thread:$0]  %s1, 256, %s28, [#allocation6], 128, 128, 8
    $region9: #{tpu_custom_call.1} parent=1 // pred_fallthru
      _
    // Predicated region
    $region10: #{tpu_custom_call.1} parent=1 // pred_check
      _
    $region11: #{tpu_custom_call.1} parent=1 // pred_check_branch
      %35 = sbr.rel (0) target = $region13
    $region12: #{tpu_custom_call.1} parent=1 // pred_region
      %36 = dma.done [#allocation3], 256
    $region13: #{tpu_custom_call.1} parent=1 // pred_fallthru
      _
    // Predicated region
    $region14: #{tpu_custom_call.1} parent=1 // pred_check
      _
    $region15: #{tpu_custom_call.1} parent=1 // pred_check_branch
      %38 = sbr.rel (0) target = $region17
    $region16: #{tpu_custom_call.1} parent=1 // pred_region
      %39 = dma.done [#allocation6], 256
    $region17: #{tpu_custom_call.1} parent=1 // pred_fallthru
      _
    %p40 = scmp.eq.s32.totalorder 0, 0
    // Predicated region
    $region18: #{tpu_custom_call.1} parent=1 // pred_check
      %p41 = pneg %p40
    $region19: #{tpu_custom_call.1} parent=1 // pred_check_branch
      %43 = sbr.rel (%p41) target = $region21
    $region20: #{tpu_custom_call.1} parent=1 // pred_region
      %44 = vst [vmem:[#allocation7] sm:$0xff] 0.0
    $region21: #{tpu_custom_call.1} parent=1 // pred_fallthru
      _
    %v45 = vld [vmem:[#allocation2] sm:$0xff]
    %v46 = vld [vmem:[#allocation2 + $0x8] sm:$0xff]
    %v47 = vld [vmem:[#allocation5] sm:$0xff]
    %v48 = vld [vmem:[#allocation5 + $0x8] sm:$0xff]
    %v49 = vsub.f32 %v45, %v47
    %v50 = vsub.f32 %v46, %v48
    %v51 = vmul.f32 %v49, %v49
    %v52 = vmul.f32 %v50, %v50
    %v53 = vld [vmem:[#allocation7] sm:$0xff]
    %v54 = vadd.f32 %v51, %v52
    %v55 = vadd.f32 %v53, %v54
    %56 = vst [vmem:[#allocation7] sm:$0xff] %v55
    // Predicated region
    $region22: #{tpu_custom_call.1} parent=1 // pred_check
      _
    $region23: #{tpu_custom_call.1} parent=1 // pred_check_branch
      %58 = sbr.rel (0) target = $region25
    $region24: #{tpu_custom_call.1} parent=1 // pred_region
      %s60 = ssub.s32 128, 128
      %61 = vsyncadd [#allocation4], %s60
      %s63 = sshll.u32 [#allocation7], 4
      %s64 = int_to_ptr.vmem [resolvable:$true] %s63
      %66 = dma.vmem_to_hbm [thread:$0]  %s64, 128, %s2, [#allocation4]
    $region25: #{tpu_custom_call.1} parent=1 // pred_fallthru
      _
    // Predicated region
    $region26: #{tpu_custom_call.1} parent=1 // pred_check
      _
    $region27: #{tpu_custom_call.1} parent=1 // pred_check_branch
      %68 = sbr.rel (0) target = $region29
    $region28: #{tpu_custom_call.1} parent=1 // pred_region
      %69 = dma.done [#allocation4], 128
    $region29: #{tpu_custom_call.1} parent=1 // pred_fallthru
      _
    %70 = vsyncpa [#allocation3], 1
    %71 = vsyncpa [#allocation6], 1
    %72 = vsyncpa [#allocation4], 1

</llo_original>
